<compile_context>
chip_gen: v6e
topology: v6e:2x2x1
jax: 0.10.0
libtpu: 0.0.40
codegen_flags: <defaults>
</compile_context>

<pallas_src>
import jax
import jax.numpy as jnp
from jax.experimental import pallas as pl
from jax.experimental.pallas import tpu as pltpu

EPS = 1e-5

# Row layout of the packed small-parameter array.
_G1, _BE1, _G2, _BE2, _B3, _G4, _BE4, _G5, _BE5, _B6 = range(10)


def dae_kernel(x_ref, w1, w2, w3, w4, w5, w6, p_ref, bot_ref, rec_ref):
    bottleneck_dim = bot_ref.shape[1]
    input_dim = rec_ref.shape[1]

    x = x_ref[...]

    def bn_relu(h, g_row, b_row):
        dim = h.shape[1]
        gamma = p_ref[g_row:g_row + 1, :dim]
        beta = p_ref[b_row:b_row + 1, :dim]
        mean = jnp.mean(h, axis=0, keepdims=True)
        var = jnp.mean((h - mean) ** 2, axis=0, keepdims=True)
        scale = gamma * jax.lax.rsqrt(var + EPS)      # rsqrt -> EUP slot
        shift = beta - mean * scale
        return jnp.maximum(h * scale + shift, 0.0)    # 2 VPU ops / elem + relu

    # ---------------- encoder ----------------
    # Pre-BN linear biases omitted: they cancel under training-mode BatchNorm.
    h = bn_relu(jnp.dot(x, w1[...], preferred_element_type=jnp.float32), _G1, _BE1)
    h = bn_relu(jnp.dot(h, w2[...], preferred_element_type=jnp.float32), _G2, _BE2)
    bottleneck = (jnp.dot(h, w3[...], preferred_element_type=jnp.float32)
                  + p_ref[_B3:_B3 + 1, :bottleneck_dim])
    bot_ref[...] = bottleneck

    # ---------------- decoder ----------------
    d = bn_relu(jnp.dot(bottleneck, w4[...], preferred_element_type=jnp.float32), _G4, _BE4)
    d = bn_relu(jnp.dot(d, w5[...], preferred_element_type=jnp.float32), _G5, _BE5)
    rec_ref[...] = (jnp.dot(d, w6[...], preferred_element_type=jnp.float32)
                    + p_ref[_B6:_B6 + 1, :input_dim])


def _pack_small(vecs, width):
    rows = []
    for v in vecs:
        v = v.reshape(-1).astype(jnp.float32)
        rows.append(jnp.pad(v, (0, width - v.shape[0])))
    return jnp.stack(rows)


def disentangled_autoencoder(x, params, bottleneck_dim):
    (w1, b1, g1, be1, w2, b2, g2, be2, w3, b3,
     w4, b4, g4, be4, w5, b5, g5, be5, w6, b6) = params
    del b1, b2, b4, b5  # cancel exactly under training-mode BatchNorm

    B, input_dim = x.shape
    invariant_dim = bottleneck_dim // 2

    width = max(g1.shape[-1], g2.shape[-1], b3.shape[-1], b6.shape[-1])
    packed = _pack_small([g1, be1, g2, be2, b3, g4, be4, g5, be5, b6], width)

    vmem = pl.BlockSpec(memory_space=pltpu.MemorySpace.VMEM)
    out_shape = (
        jax.ShapeDtypeStruct((B, bottleneck_dim), jnp.float32),
        jax.ShapeDtypeStruct((B, input_dim), jnp.float32),
    )
    bot, rec = pl.pallas_call(
        dae_kernel,
        out_shape=out_shape,
        in_specs=[vmem] * 8,
        out_specs=(vmem, vmem),
    )(x, w1, w2, w3, w4, w5, w6, packed)

    # Lane-misaligned split handled as a free XLA slice outside the kernel.
    invariant = bot[:, :invariant_dim]
    variant = bot[:, invariant_dim:]
    return invariant, variant, rec, bot


# ------------------- deterministic parameter init (PyTorch-style) -------------------
def _linear_params(key, in_dim, out_dim):
    kw, kb = jax.random.split(key)
    bound = 1.0 / jnp.sqrt(in_dim)
    # Weight stored pre-transposed: [in, out].  Bias kept 2-D: [1, out].
    w = jax.random.uniform(kw, (in_dim, out_dim), jnp.float32, -bound, bound)
    b = jax.random.uniform(kb, (1, out_dim), jnp.float32, -bound, bound)
    return w, b


def _bn_params(dim):
    # PyTorch BatchNorm1d init: weight = 1, bias = 0.
    return jnp.ones((1, dim), jnp.float32), jnp.zeros((1, dim), jnp.float32)


def make_params(key, input_dim, hidden_dim, bottleneck_dim):
    keys = jax.random.split(key, 6)
    w1, b1 = _linear_params(keys[0], input_dim, hidden_dim)
    g1, be1 = _bn_params(hidden_dim)
    w2, b2 = _linear_params(keys[1], hidden_dim, hidden_dim // 2)
    g2, be2 = _bn_params(hidden_dim // 2)
    w3, b3 = _linear_params(keys[2], hidden_dim // 2, bottleneck_dim)
    w4, b4 = _linear_params(keys[3], bottleneck_dim, hidden_dim // 2)
    g4, be4 = _bn_params(hidden_dim // 2)
    w5, b5 = _linear_params(keys[4], hidden_dim // 2, hidden_dim)
    g5, be5 = _bn_params(hidden_dim)
    w6, b6 = _linear_params(keys[5], hidden_dim, input_dim)
    return (w1, b1, g1, be1,
            w2, b2, g2, be2,
            w3, b3,
            w4, b4, g4, be4,
            w5, b5, g5, be5,
            w6, b6)


# ------------------- pure-JAX reference (keeps the biases, like PyTorch) -------------------
def reference_forward(x, params, bottleneck_dim):
    (w1, b1, g1, be1, w2, b2, g2, be2, w3, b3,
     w4, b4, g4, be4, w5, b5, g5, be5, w6, b6) = params
    inv_dim = bottleneck_dim // 2

    def bn(h, g, be):
        m = jnp.mean(h, axis=0, keepdims=True)
        v = jnp.mean((h - m) ** 2, axis=0, keepdims=True)
        return (h - m) / jnp.sqrt(v + EPS) * g + be

    h = jnp.maximum(bn(x @ w1 + b1, g1, be1), 0.0)
    h = jnp.maximum(bn(h @ w2 + b2, g2, be2), 0.0)
    bot = h @ w3 + b3
    d = jnp.maximum(bn(bot @ w4 + b4, g4, be4), 0.0)
    d = jnp.maximum(bn(d @ w5 + b5, g5, be5), 0.0)
    rec = d @ w6 + b6
    return bot[:, :inv_dim], bot[:, inv_dim:], rec, bot


if __name__ == "__main__":
    BATCH, INPUT_DIM, HIDDEN_DIM, BOTTLENECK_DIM = 8, 16, 32, 8

    key = jax.random.PRNGKey(0)
    kx, kp = jax.random.split(key)
    x = jax.random.normal(kx, (BATCH, INPUT_DIM), jnp.float32)
    params = make_params(kp, INPUT_DIM, HIDDEN_DIM, BOTTLENECK_DIM)

    inv, varnt, rec, bot = disentangled_autoencoder(x, params, BOTTLENECK_DIM)
    jax.block_until_ready((inv, varnt, rec, bot))

    ref = reference_forward(x, params, BOTTLENECK_DIM)
    for got, want in zip((inv, varnt, rec, bot), ref):
        assert got.shape == want.shape and got.dtype == want.dtype
        assert jnp.allclose(got, want, rtol=1e-4, atol=1e-4)

    print("KERNEL_OK")
</pallas_src>

<mosaic_0001>
module attributes {stable_mosaic.version = 11 : i64} {
  func.func @dae_kernel(%arg0: memref<8x16xf32, #tpu.memory_space<vmem>>, %arg1: memref<16x32xf32, #tpu.memory_space<vmem>>, %arg2: memref<32x16xf32, #tpu.memory_space<vmem>>, %arg3: memref<16x8xf32, #tpu.memory_space<vmem>>, %arg4: memref<8x16xf32, #tpu.memory_space<vmem>>, %arg5: memref<16x32xf32, #tpu.memory_space<vmem>>, %arg6: memref<32x16xf32, #tpu.memory_space<vmem>>, %arg7: memref<10x32xf32, #tpu.memory_space<vmem>>, %arg8: memref<8x8xf32, #tpu.memory_space<vmem>>, %arg9: memref<8x16xf32, #tpu.memory_space<vmem>>) attributes {dimension_semantics = [], scalar_prefetch = 0 : i64, scratch_operands = 0 : i64, tpu.core_type = #tpu.core_type<tc>} {
    %c0 = arith.constant 0 : index
    %c0_0 = arith.constant 0 : index
    %0 = vector.load %arg0[%c0, %c0_0] : memref<8x16xf32, #tpu.memory_space<vmem>>, vector<8x16xf32>
    %c0_1 = arith.constant 0 : index
    %c0_2 = arith.constant 0 : index
    %1 = vector.load %arg1[%c0_1, %c0_2] : memref<16x32xf32, #tpu.memory_space<vmem>>, vector<16x32xf32>
    %cst = arith.constant dense<0.000000e+00> : vector<8x32xf32>
    %2 = tpu.matmul %0, %1, %cst {dimension_numbers = #tpu.dot_dimension_numbers<[1], [0], [0], [1], [0, 0, 1, 1], [], []>} : vector<8x16xf32>, vector<16x32xf32>, vector<8x32xf32> -> vector<8x32xf32>
    %c0_3 = arith.constant 0 : index
    %c0_4 = arith.constant 0 : index
    %3 = vector.load %arg7[%c0_3, %c0_4] : memref<10x32xf32, #tpu.memory_space<vmem>>, vector<1x32xf32>
    %c1 = arith.constant 1 : index
    %c0_5 = arith.constant 0 : index
    %4 = vector.load %arg7[%c1, %c0_5] : memref<10x32xf32, #tpu.memory_space<vmem>>, vector<1x32xf32>
    %cst_6 = arith.constant dense<0.000000e+00> : vector<32xf32>
    %5 = vector.multi_reduction <add>, %2, %cst_6 [0] : vector<8x32xf32> to vector<32xf32>
    %6 = vector.shape_cast %5 : vector<32xf32> to vector<1x32xf32>
    %cst_7 = arith.constant 8.000000e+00 : f32
    %7 = vector.broadcast %cst_7 : f32 to vector<1x32xf32>
    %8 = arith.divf %6, %7 : vector<1x32xf32>
    %9 = vector.broadcast %8 : vector<1x32xf32> to vector<8x32xf32>
    %10 = arith.subf %2, %9 : vector<8x32xf32>
    %11 = arith.mulf %10, %10 : vector<8x32xf32>
    %cst_8 = arith.constant dense<0.000000e+00> : vector<32xf32>
    %12 = vector.multi_reduction <add>, %11, %cst_8 [0] : vector<8x32xf32> to vector<32xf32>
    %13 = vector.shape_cast %12 : vector<32xf32> to vector<1x32xf32>
    %cst_9 = arith.constant 8.000000e+00 : f32
    %14 = vector.broadcast %cst_9 : f32 to vector<1x32xf32>
    %15 = arith.divf %13, %14 : vector<1x32xf32>
    %cst_10 = arith.constant 9.99999974E-6 : f32
    %16 = vector.broadcast %cst_10 : f32 to vector<1x32xf32>
    %17 = arith.addf %15, %16 : vector<1x32xf32>
    %18 = math.rsqrt %17 : vector<1x32xf32>
    %19 = arith.mulf %3, %18 : vector<1x32xf32>
    %20 = arith.mulf %8, %19 : vector<1x32xf32>
    %21 = arith.subf %4, %20 : vector<1x32xf32>
    %22 = vector.broadcast %19 : vector<1x32xf32> to vector<8x32xf32>
    %23 = arith.mulf %2, %22 : vector<8x32xf32>
    %24 = vector.broadcast %21 : vector<1x32xf32> to vector<8x32xf32>
    %25 = arith.addf %23, %24 : vector<8x32xf32>
    %cst_11 = arith.constant 0.000000e+00 : f32
    %26 = vector.broadcast %cst_11 : f32 to vector<8x32xf32>
    %27 = arith.maximumf %25, %26 : vector<8x32xf32>
    %c0_12 = arith.constant 0 : index
    %c0_13 = arith.constant 0 : index
    %28 = vector.load %arg2[%c0_12, %c0_13] : memref<32x16xf32, #tpu.memory_space<vmem>>, vector<32x16xf32>
    %cst_14 = arith.constant dense<0.000000e+00> : vector<8x16xf32>
    %29 = tpu.matmul %27, %28, %cst_14 {dimension_numbers = #tpu.dot_dimension_numbers<[1], [0], [0], [1], [0, 0, 1, 1], [], []>} : vector<8x32xf32>, vector<32x16xf32>, vector<8x16xf32> -> vector<8x16xf32>
    %c2 = arith.constant 2 : index
    %c0_15 = arith.constant 0 : index
    %30 = vector.load %arg7[%c2, %c0_15] : memref<10x32xf32, #tpu.memory_space<vmem>>, vector<1x16xf32>
    %c3 = arith.constant 3 : index
    %c0_16 = arith.constant 0 : index
    %31 = vector.load %arg7[%c3, %c0_16] : memref<10x32xf32, #tpu.memory_space<vmem>>, vector<1x16xf32>
    %cst_17 = arith.constant dense<0.000000e+00> : vector<16xf32>
    %32 = vector.multi_reduction <add>, %29, %cst_17 [0] : vector<8x16xf32> to vector<16xf32>
    %33 = vector.shape_cast %32 : vector<16xf32> to vector<1x16xf32>
    %cst_18 = arith.constant 8.000000e+00 : f32
    %34 = vector.broadcast %cst_18 : f32 to vector<1x16xf32>
    %35 = arith.divf %33, %34 : vector<1x16xf32>
    %36 = vector.broadcast %35 : vector<1x16xf32> to vector<8x16xf32>
    %37 = arith.subf %29, %36 : vector<8x16xf32>
    %38 = arith.mulf %37, %37 : vector<8x16xf32>
    %cst_19 = arith.constant dense<0.000000e+00> : vector<16xf32>
    %39 = vector.multi_reduction <add>, %38, %cst_19 [0] : vector<8x16xf32> to vector<16xf32>
    %40 = vector.shape_cast %39 : vector<16xf32> to vector<1x16xf32>
    %cst_20 = arith.constant 8.000000e+00 : f32
    %41 = vector.broadcast %cst_20 : f32 to vector<1x16xf32>
    %42 = arith.divf %40, %41 : vector<1x16xf32>
    %cst_21 = arith.constant 9.99999974E-6 : f32
    %43 = vector.broadcast %cst_21 : f32 to vector<1x16xf32>
    %44 = arith.addf %42, %43 : vector<1x16xf32>
    %45 = math.rsqrt %44 : vector<1x16xf32>
    %46 = arith.mulf %30, %45 : vector<1x16xf32>
    %47 = arith.mulf %35, %46 : vector<1x16xf32>
    %48 = arith.subf %31, %47 : vector<1x16xf32>
    %49 = vector.broadcast %46 : vector<1x16xf32> to vector<8x16xf32>
    %50 = arith.mulf %29, %49 : vector<8x16xf32>
    %51 = vector.broadcast %48 : vector<1x16xf32> to vector<8x16xf32>
    %52 = arith.addf %50, %51 : vector<8x16xf32>
    %cst_22 = arith.constant 0.000000e+00 : f32
    %53 = vector.broadcast %cst_22 : f32 to vector<8x16xf32>
    %54 = arith.maximumf %52, %53 : vector<8x16xf32>
    %c0_23 = arith.constant 0 : index
    %c0_24 = arith.constant 0 : index
    %55 = vector.load %arg3[%c0_23, %c0_24] : memref<16x8xf32, #tpu.memory_space<vmem>>, vector<16x8xf32>
    %cst_25 = arith.constant dense<0.000000e+00> : vector<8x8xf32>
    %56 = tpu.matmul %54, %55, %cst_25 {dimension_numbers = #tpu.dot_dimension_numbers<[1], [0], [0], [1], [0, 0, 1, 1], [], []>} : vector<8x16xf32>, vector<16x8xf32>, vector<8x8xf32> -> vector<8x8xf32>
    %c4 = arith.constant 4 : index
    %c0_26 = arith.constant 0 : index
    %57 = vector.load %arg7[%c4, %c0_26] : memref<10x32xf32, #tpu.memory_space<vmem>>, vector<1x8xf32>
    %58 = vector.broadcast %57 : vector<1x8xf32> to vector<8x8xf32>
    %59 = arith.addf %56, %58 : vector<8x8xf32>
    %c0_27 = arith.constant 0 : index
    %c0_28 = arith.constant 0 : index
    %60 = vector.load %arg8[%c0_27, %c0_28] : memref<8x8xf32, #tpu.memory_space<vmem>>, vector<8x8xf32>
    tpu.vector_store %arg8[%c0_27, %c0_28], %59 {strides = array<i32>} : memref<8x8xf32, #tpu.memory_space<vmem>>, vector<8x8xf32>,
    %c0_29 = arith.constant 0 : index
    %c0_30 = arith.constant 0 : index
    %61 = vector.load %arg4[%c0_29, %c0_30] : memref<8x16xf32, #tpu.memory_space<vmem>>, vector<8x16xf32>
    %cst_31 = arith.constant dense<0.000000e+00> : vector<8x16xf32>
    %62 = tpu.matmul %59, %61, %cst_31 {dimension_numbers = #tpu.dot_dimension_numbers<[1], [0], [0], [1], [0, 0, 1, 1], [], []>} : vector<8x8xf32>, vector<8x16xf32>, vector<8x16xf32> -> vector<8x16xf32>
    %c5 = arith.constant 5 : index
    %c0_32 = arith.constant 0 : index
    %63 = vector.load %arg7[%c5, %c0_32] : memref<10x32xf32, #tpu.memory_space<vmem>>, vector<1x16xf32>
    %c6 = arith.constant 6 : index
    %c0_33 = arith.constant 0 : index
    %64 = vector.load %arg7[%c6, %c0_33] : memref<10x32xf32, #tpu.memory_space<vmem>>, vector<1x16xf32>
    %cst_34 = arith.constant dense<0.000000e+00> : vector<16xf32>
    %65 = vector.multi_reduction <add>, %62, %cst_34 [0] : vector<8x16xf32> to vector<16xf32>
    %66 = vector.shape_cast %65 : vector<16xf32> to vector<1x16xf32>
    %cst_35 = arith.constant 8.000000e+00 : f32
    %67 = vector.broadcast %cst_35 : f32 to vector<1x16xf32>
    %68 = arith.divf %66, %67 : vector<1x16xf32>
    %69 = vector.broadcast %68 : vector<1x16xf32> to vector<8x16xf32>
    %70 = arith.subf %62, %69 : vector<8x16xf32>
    %71 = arith.mulf %70, %70 : vector<8x16xf32>
    %cst_36 = arith.constant dense<0.000000e+00> : vector<16xf32>
    %72 = vector.multi_reduction <add>, %71, %cst_36 [0] : vector<8x16xf32> to vector<16xf32>
    %73 = vector.shape_cast %72 : vector<16xf32> to vector<1x16xf32>
    %cst_37 = arith.constant 8.000000e+00 : f32
    %74 = vector.broadcast %cst_37 : f32 to vector<1x16xf32>
    %75 = arith.divf %73, %74 : vector<1x16xf32>
    %cst_38 = arith.constant 9.99999974E-6 : f32
    %76 = vector.broadcast %cst_38 : f32 to vector<1x16xf32>
    %77 = arith.addf %75, %76 : vector<1x16xf32>
    %78 = math.rsqrt %77 : vector<1x16xf32>
    %79 = arith.mulf %63, %78 : vector<1x16xf32>
    %80 = arith.mulf %68, %79 : vector<1x16xf32>
    %81 = arith.subf %64, %80 : vector<1x16xf32>
    %82 = vector.broadcast %79 : vector<1x16xf32> to vector<8x16xf32>
    %83 = arith.mulf %62, %82 : vector<8x16xf32>
    %84 = vector.broadcast %81 : vector<1x16xf32> to vector<8x16xf32>
    %85 = arith.addf %83, %84 : vector<8x16xf32>
    %cst_39 = arith.constant 0.000000e+00 : f32
    %86 = vector.broadcast %cst_39 : f32 to vector<8x16xf32>
    %87 = arith.maximumf %85, %86 : vector<8x16xf32>
    %c0_40 = arith.constant 0 : index
    %c0_41 = arith.constant 0 : index
    %88 = vector.load %arg5[%c0_40, %c0_41] : memref<16x32xf32, #tpu.memory_space<vmem>>, vector<16x32xf32>
    %cst_42 = arith.constant dense<0.000000e+00> : vector<8x32xf32>
    %89 = tpu.matmul %87, %88, %cst_42 {dimension_numbers = #tpu.dot_dimension_numbers<[1], [0], [0], [1], [0, 0, 1, 1], [], []>} : vector<8x16xf32>, vector<16x32xf32>, vector<8x32xf32> -> vector<8x32xf32>
    %c7 = arith.constant 7 : index
    %c0_43 = arith.constant 0 : index
    %90 = vector.load %arg7[%c7, %c0_43] : memref<10x32xf32, #tpu.memory_space<vmem>>, vector<1x32xf32>
    %c8 = arith.constant 8 : index
    %c0_44 = arith.constant 0 : index
    %91 = vector.load %arg7[%c8, %c0_44] : memref<10x32xf32, #tpu.memory_space<vmem>>, vector<1x32xf32>
    %cst_45 = arith.constant dense<0.000000e+00> : vector<32xf32>
    %92 = vector.multi_reduction <add>, %89, %cst_45 [0] : vector<8x32xf32> to vector<32xf32>
    %93 = vector.shape_cast %92 : vector<32xf32> to vector<1x32xf32>
    %cst_46 = arith.constant 8.000000e+00 : f32
    %94 = vector.broadcast %cst_46 : f32 to vector<1x32xf32>
    %95 = arith.divf %93, %94 : vector<1x32xf32>
    %96 = vector.broadcast %95 : vector<1x32xf32> to vector<8x32xf32>
    %97 = arith.subf %89, %96 : vector<8x32xf32>
    %98 = arith.mulf %97, %97 : vector<8x32xf32>
    %cst_47 = arith.constant dense<0.000000e+00> : vector<32xf32>
    %99 = vector.multi_reduction <add>, %98, %cst_47 [0] : vector<8x32xf32> to vector<32xf32>
    %100 = vector.shape_cast %99 : vector<32xf32> to vector<1x32xf32>
    %cst_48 = arith.constant 8.000000e+00 : f32
    %101 = vector.broadcast %cst_48 : f32 to vector<1x32xf32>
    %102 = arith.divf %100, %101 : vector<1x32xf32>
    %cst_49 = arith.constant 9.99999974E-6 : f32
    %103 = vector.broadcast %cst_49 : f32 to vector<1x32xf32>
    %104 = arith.addf %102, %103 : vector<1x32xf32>
    %105 = math.rsqrt %104 : vector<1x32xf32>
    %106 = arith.mulf %90, %105 : vector<1x32xf32>
    %107 = arith.mulf %95, %106 : vector<1x32xf32>
    %108 = arith.subf %91, %107 : vector<1x32xf32>
    %109 = vector.broadcast %106 : vector<1x32xf32> to vector<8x32xf32>
    %110 = arith.mulf %89, %109 : vector<8x32xf32>
    %111 = vector.broadcast %108 : vector<1x32xf32> to vector<8x32xf32>
    %112 = arith.addf %110, %111 : vector<8x32xf32>
    %cst_50 = arith.constant 0.000000e+00 : f32
    %113 = vector.broadcast %cst_50 : f32 to vector<8x32xf32>
    %114 = arith.maximumf %112, %113 : vector<8x32xf32>
    %c0_51 = arith.constant 0 : index
    %c0_52 = arith.constant 0 : index
    %115 = vector.load %arg6[%c0_51, %c0_52] : memref<32x16xf32, #tpu.memory_space<vmem>>, vector<32x16xf32>
    %cst_53 = arith.constant dense<0.000000e+00> : vector<8x16xf32>
    %116 = tpu.matmul %114, %115, %cst_53 {dimension_numbers = #tpu.dot_dimension_numbers<[1], [0], [0], [1], [0, 0, 1, 1], [], []>} : vector<8x32xf32>, vector<32x16xf32>, vector<8x16xf32> -> vector<8x16xf32>
    %c9 = arith.constant 9 : index
    %c0_54 = arith.constant 0 : index
    %117 = vector.load %arg7[%c9, %c0_54] : memref<10x32xf32, #tpu.memory_space<vmem>>, vector<1x16xf32>
    %118 = vector.broadcast %117 : vector<1x16xf32> to vector<8x16xf32>
    %119 = arith.addf %116, %118 : vector<8x16xf32>
    %c0_55 = arith.constant 0 : index
    %c0_56 = arith.constant 0 : index
    %120 = vector.load %arg9[%c0_55, %c0_56] : memref<8x16xf32, #tpu.memory_space<vmem>>, vector<8x16xf32>
    tpu.vector_store %arg9[%c0_55, %c0_56], %119 {strides = array<i32>} : memref<8x16xf32, #tpu.memory_space<vmem>>, vector<8x16xf32>,
    return
  }
}

</mosaic_0001>

<llo_original>
// kernel: tpu_custom_call.1
$region0: #{tpu_custom_call.1}
  #allocation0 [shape = 'u32[]', space=smem, size = 0x4, offset = 0x4, fixed_abs, tag = 'smem constant byte address 0x4 - core index']
  #allocation1 [shape = 'u32[144,128]{1,0:T(1,128)}', space=vmem, size = 0x12000, scoped, tag = 'internal scratch']
  %s0 = inlined_call_operand.vmem [shape: f32[8,16], index: 0, kind: input, shape index: {}]
  %s1 = inlined_call_operand.vmem [shape: f32[16,32], index: 1, kind: input, shape index: {}]
  %s2 = inlined_call_operand.vmem [shape: f32[32,16], index: 2, kind: input, shape index: {}]
  %s3 = inlined_call_operand.vmem [shape: f32[16,8], index: 3, kind: input, shape index: {}]
  %s4 = inlined_call_operand.vmem [shape: f32[8,16], index: 4, kind: input, shape index: {}]
  %s5 = inlined_call_operand.vmem [shape: f32[16,32], index: 5, kind: input, shape index: {}]
  %s6 = inlined_call_operand.vmem [shape: f32[32,16], index: 6, kind: input, shape index: {}]
  %s7 = inlined_call_operand.vmem [shape: f32[10,32], index: 7, kind: input, shape index: {}]
  %s8 = inlined_call_operand.hbm [shape: f32[8,8], index: 8, kind: output, shape index: {0}]
  %s9 = inlined_call_operand.hbm [shape: f32[8,16], index: 9, kind: output, shape index: {1}]
  %10 = xla_tuple %s8, %s9
  %s11 = sld [smem:[#allocation0]]
  $region50: #{tpu_custom_call.1} parent=0
    _
  %s13 = ssub.s32 1, %s11
  %s14 = scalar_select 0, %s13, %s11
  $region1: #{tpu_custom_call.1} parent=0
    #allocation2 [shape = 'u8[4096]{0}', space=vmem, size = 0x1000, scoped, tag = 'output window, operand 0, single buffered']
    #allocation3 [shape = 's32[1]{0}', space=sflag, size = 0x4, scoped, tag = 'scoped memory for tpu_custom_call.1']
    #allocation4 [shape = 'u8[4096]{0}', space=vmem, size = 0x1000, scoped, tag = 'output window, operand 1, single buffered']
    #allocation5 [shape = 's32[1]{0}', space=sflag, size = 0x4, scoped, tag = 'scoped memory for tpu_custom_call.1']
    %15 = vsyncpa [#allocation3], 0
    %16 = vsyncpa [#allocation5], 0
    // Predicated region
    $region2: #{tpu_custom_call.1} parent=1 // pred_check
      _
    $region3: #{tpu_custom_call.1} parent=1 // pred_check_branch
      %18 = sbr.rel (0) target = $region5
    $region4: #{tpu_custom_call.1} parent=1 // pred_region
      _
    $region5: #{tpu_custom_call.1} parent=1 // pred_fallthru
      _
    // Predicated region
    $region6: #{tpu_custom_call.1} parent=1 // pred_check
      _
    $region7: #{tpu_custom_call.1} parent=1 // pred_check_branch
      %20 = sbr.rel (0) target = $region9
    $region8: #{tpu_custom_call.1} parent=1 // pred_region
      _
    $region9: #{tpu_custom_call.1} parent=1 // pred_fallthru
      _
    // Predicated region
    $region10: #{tpu_custom_call.1} parent=1 // pred_check
      _
    $region11: #{tpu_custom_call.1} parent=1 // pred_check_branch
      %22 = sbr.rel (0) target = $region13
    $region12: #{tpu_custom_call.1} parent=1 // pred_region
      _
    $region13: #{tpu_custom_call.1} parent=1 // pred_fallthru
      _
    // Predicated region
    $region14: #{tpu_custom_call.1} parent=1 // pred_check
      _
    $region15: #{tpu_custom_call.1} parent=1 // pred_check_branch
      %24 = sbr.rel (0) target = $region17
    $region16: #{tpu_custom_call.1} parent=1 // pred_region
      _
    $region17: #{tpu_custom_call.1} parent=1 // pred_fallthru
      _
    // Predicated region
    $region18: #{tpu_custom_call.1} parent=1 // pred_check
      _
    $region19: #{tpu_custom_call.1} parent=1 // pred_check_branch
      %26 = sbr.rel (0) target = $region21
    $region20: #{tpu_custom_call.1} parent=1 // pred_region
      _
    $region21: #{tpu_custom_call.1} parent=1 // pred_fallthru
      _
    // Predicated region
    $region22: #{tpu_custom_call.1} parent=1 // pred_check
      _
    $region23: #{tpu_custom_call.1} parent=1 // pred_check_branch
      %28 = sbr.rel (0) target = $region25
    $region24: #{tpu_custom_call.1} parent=1 // pred_region
      _
    $region25: #{tpu_custom_call.1} parent=1 // pred_fallthru
      _
    // Predicated region
    $region26: #{tpu_custom_call.1} parent=1 // pred_check
      _
    $region27: #{tpu_custom_call.1} parent=1 // pred_check_branch
      %30 = sbr.rel (0) target = $region29
    $region28: #{tpu_custom_call.1} parent=1 // pred_region
      _
    $region29: #{tpu_custom_call.1} parent=1 // pred_fallthru
      _
    // Predicated region
    $region30: #{tpu_custom_call.1} parent=1 // pred_check
      _
    $region31: #{tpu_custom_call.1} parent=1 // pred_check_branch
      %32 = sbr.rel (0) target = $region33
    $region32: #{tpu_custom_call.1} parent=1 // pred_region
      _
    $region33: #{tpu_custom_call.1} parent=1 // pred_fallthru
      _
    %v33 = vld [vmem:[%s0] sm:$0xff]
    %v34 = vld [vmem:[%s1] sm:$0xff]
    %v35 = vld [vmem:[%s1 + $0x8] sm:$0xff]
    %vm36 = vcmask 130048
    %v38 = vsel %vm36, %v33, 0
    %40 = vmatprep.subr.mxu0 0.0
    %41 = vmatpush1.msra.mxu0 0.0
    %42 = vmatprep.subr.mxu0 0.0
    %43 = vmatpush1.msra.mxu0 0.0
    %44 = vmatprep.subr.mxu0 0.0
    %45 = vmatpush1.msra.mxu0 0.0
    %46 = vmatprep.subr.mxu0 0.0
    %47 = vmatpush1.msra.mxu0 0.0
    %48 = vmatprep.subr.mxu0 0.0
    %49 = vmatpush1.msra.mxu0 0.0
    %50 = vmatprep.subr.mxu0 0.0
    %51 = vmatpush1.msra.mxu0 0.0
    %52 = vmatprep.subr.mxu0 0.0
    %53 = vmatpush1.msra.mxu0 0.0
    %54 = vmatprep.subr.mxu0 0.0
    %55 = vmatpush1.msra.mxu0 0.0
    %56 = vmatprep.subr.mxu0 0.0
    %57 = vmatpush1.msra.mxu0 0.0
    %58 = vmatprep.subr.mxu0 0.0
    %59 = vmatpush1.msra.mxu0 0.0
    %60 = vmatprep.subr.mxu0 0.0
    %61 = vmatpush1.msra.mxu0 0.0
    %62 = vmatprep.subr.mxu0 0.0
    %63 = vmatpush1.msra.mxu0 0.0
    %64 = vmatprep.subr.mxu0 0.0
    %65 = vmatpush1.msra.mxu0 0.0
    %66 = vmatprep.subr.mxu0 0.0
    %67 = vmatpush1.msra.mxu0 0.0
    %68 = vmatprep.subr.mxu0 0.0
    %69 = vmatpush1.msra.mxu0 %v35
    %70 = vmatprep.subr.mxu0 0.0
    %71 = vmatpush1.msra.mxu0 %v34
    %72 = vmatprep.subr.mxu0 0.0
    %73 = vmatpush2.msra.mxu0 0.0
    %74 = vmatprep.subr.mxu0 0.0
    %75 = vmatpush2.msra.mxu0 0.0
    %76 = vmatprep.subr.mxu0 0.0
    %77 = vmatpush2.msra.mxu0 0.0
    %78 = vmatprep.subr.mxu0 0.0
    %79 = vmatpush2.msra.mxu0 0.0
    %80 = vmatprep.subr.mxu0 0.0
    %81 = vmatpush2.msra.mxu0 0.0
    %82 = vmatprep.subr.mxu0 0.0
    %83 = vmatpush2.msra.mxu0 0.0
    %84 = vmatprep.subr.mxu0 0.0
    %85 = vmatpush2.msra.mxu0 0.0
    %86 = vmatprep.subr.mxu0 0.0
    %87 = vmatpush2.msra.mxu0 0.0
    %88 = vmatprep.subr.mxu0 0.0
    %89 = vmatpush2.msra.mxu0 0.0
    %90 = vmatprep.subr.mxu0 0.0
    %91 = vmatpush2.msra.mxu0 0.0
    %92 = vmatprep.subr.mxu0 0.0
    %93 = vmatpush2.msra.mxu0 0.0
    %94 = vmatprep.subr.mxu0 0.0
    %95 = vmatpush2.msra.mxu0 0.0
    %96 = vmatprep.subr.mxu0 0.0
    %97 = vmatpush2.msra.mxu0 0.0
    %98 = vmatprep.subr.mxu0 0.0
    %99 = vmatpush2.msra.mxu0 0.0
    %100 = vmatprep.subr.mxu0 0.0
    %101 = vmatpush2.msra.mxu0 0.0
    %102 = vmatprep.subr.mxu0 0.0
    %103 = vmatpush2.msra.mxu0 0.0
    %104 = vmatprep.mubr.f32.mxu0 0.0
    %105 = vmatmul.mubr.f32.gmra.mxu0 %v38
    %v106 = vpop.f32.mrf.mxu0
    %v107 = vadd.f32 0.0, %v106
    %v108 = vpop.f32.mrf.mxu0
    %109 = vdwg.mxu0
    %v110 = vld [vmem:[%s7] sm:$0x1]
    %v111 = vld [vmem:[%s7 + $0x1] sm:$0x1]
    %vm112 = vcmask 261120
    %v113 = vsel %vm112, %v107, 0.0
    %v114 = vrot.slane %v113, 4
    %v115 = vadd.f32 %v113, %v114
    %v116 = vrot.slane %v115, 2
    %v117 = vadd.f32 %v115, %v116
    %v118 = vrot.slane %v117, 1
    %v119 = vadd.f32 %v117, %v118
    %v120 = vrcp.pop 8.0
    %v121 = vmul.f32 %v119, %v120
    %v122 = vsub.f32 %v107, %v121
    %v123 = vmul.f32 %v122, %v122
    %v124 = vsel %vm112, %v123, 0.0
    %v125 = vrot.slane %v124, 4
    %v126 = vadd.f32 %v124, %v125
    %v127 = vrot.slane %v126, 2
    %v128 = vadd.f32 %v126, %v127
    %v129 = vrot.slane %v128, 1
    %v130 = vadd.f32 %v128, %v129
    %v131 = vmul.f32 %v130, %v120
    %v132 = vadd.f32 %v131, 1e-05
    %v133 = vrsqrt.pop %v132
    %v134 = vmul.f32 %v110, %v133
    %v135 = vmul.f32 %v121, %v134
    %v136 = vsub.f32 %v111, %v135
    %v137 = vlaneseq
    %v138 = vshrl.u32 %v137, 7
    %v139 = vsub.s32 0, %v138
    %v140 = vrot.slane %v134, %v139
    %v141 = vmul.f32 %v107, %v140
    %v142 = vlaneseq
    %v143 = vshrl.u32 %v142, 7
    %v144 = vsub.s32 0, %v143
    %v145 = vrot.slane %v136, %v144
    %v146 = vadd.f32 %v141, %v145
    %v147 = vmax.f32 %v146, 0.0
    %v148 = vld [vmem:[%s2] sm:$0xff]
    %v149 = vld [vmem:[%s2 + $0x8] sm:$0xff]
    %v150 = vld [vmem:[%s2 + $0x10] sm:$0xff]
    %v151 = vld [vmem:[%s2 + $0x18] sm:$0xff]
    %v153 = vsel %vm112, %v147, 0
    %155 = vmatprep.subr.mxu0 0.0
    %156 = vmatpush1.msra.mxu0 0.0
    %157 = vmatprep.subr.mxu0 0.0
    %158 = vmatpush1.msra.mxu0 0.0
    %159 = vmatprep.subr.mxu0 0.0
    %160 = vmatpush1.msra.mxu0 0.0
    %161 = vmatprep.subr.mxu0 0.0
    %162 = vmatpush1.msra.mxu0 0.0
    %163 = vmatprep.subr.mxu0 0.0
    %164 = vmatpush1.msra.mxu0 0.0
    %165 = vmatprep.subr.mxu0 0.0
    %166 = vmatpush1.msra.mxu0 0.0
    %167 = vmatprep.subr.mxu0 0.0
    %168 = vmatpush1.msra.mxu0 0.0
    %169 = vmatprep.subr.mxu0 0.0
    %170 = vmatpush1.msra.mxu0 0.0
    %171 = vmatprep.subr.mxu0 0.0
    %172 = vmatpush1.msra.mxu0 0.0
    %173 = vmatprep.subr.mxu0 0.0
    %174 = vmatpush1.msra.mxu0 0.0
    %175 = vmatprep.subr.mxu0 0.0
    %176 = vmatpush1.msra.mxu0 0.0
    %177 = vmatprep.subr.mxu0 0.0
    %178 = vmatpush1.msra.mxu0 0.0
    %179 = vmatprep.subr.mxu0 0.0
    %180 = vmatpush1.msra.mxu0 %v151
    %181 = vmatprep.subr.mxu0 0.0
    %182 = vmatpush1.msra.mxu0 %v150
    %183 = vmatprep.subr.mxu0 0.0
    %184 = vmatpush1.msra.mxu0 %v149
    %185 = vmatprep.subr.mxu0 0.0
    %186 = vmatpush1.msra.mxu0 %v148
    %187 = vmatprep.subr.mxu0 0.0
    %188 = vmatpush2.msra.mxu0 0.0
    %189 = vmatprep.subr.mxu0 0.0
    %190 = vmatpush2.msra.mxu0 0.0
    %191 = vmatprep.subr.mxu0 0.0
    %192 = vmatpush2.msra.mxu0 0.0
    %193 = vmatprep.subr.mxu0 0.0
    %194 = vmatpush2.msra.mxu0 0.0
    %195 = vmatprep.subr.mxu0 0.0
    %196 = vmatpush2.msra.mxu0 0.0
    %197 = vmatprep.subr.mxu0 0.0
    %198 = vmatpush2.msra.mxu0 0.0
    %199 = vmatprep.subr.mxu0 0.0
    %200 = vmatpush2.msra.mxu0 0.0
    %201 = vmatprep.subr.mxu0 0.0
    %202 = vmatpush2.msra.mxu0 0.0
    %203 = vmatprep.subr.mxu0 0.0
    %204 = vmatpush2.msra.mxu0 0.0
    %205 = vmatprep.subr.mxu0 0.0
    %206 = vmatpush2.msra.mxu0 0.0
    %207 = vmatprep.subr.mxu0 0.0
    %208 = vmatpush2.msra.mxu0 0.0
    %209 = vmatprep.subr.mxu0 0.0
    %210 = vmatpush2.msra.mxu0 0.0
    %211 = vmatprep.subr.mxu0 0.0
    %212 = vmatpush2.msra.mxu0 0.0
    %213 = vmatprep.subr.mxu0 0.0
    %214 = vmatpush2.msra.mxu0 0.0
    %215 = vmatprep.subr.mxu0 0.0
    %216 = vmatpush2.msra.mxu0 0.0
    %217 = vmatprep.subr.mxu0 0.0
    %218 = vmatpush2.msra.mxu0 0.0
    %219 = vmatprep.mubr.f32.mxu0 0.0
    %220 = vmatmul.mubr.f32.gmra.mxu0 %v153
    %v221 = vpop.f32.mrf.mxu0
    %v222 = vadd.f32 0.0, %v221
    %v223 = vpop.f32.mrf.mxu0
    %224 = vdwg.mxu0
    %v225 = vld [vmem:[%s7 + $0x2] sm:$0x1]
    %v226 = vld [vmem:[%s7 + $0x3] sm:$0x1]
    %v227 = vsel %vm36, %v222, 0.0
    %v228 = vrot.slane %v227, 4
    %v229 = vadd.f32 %v227, %v228
    %v230 = vrot.slane %v229, 2
    %v231 = vadd.f32 %v229, %v230
    %v232 = vrot.slane %v231, 1
    %v233 = vadd.f32 %v231, %v232
    %v234 = vmul.f32 %v233, %v120
    %v235 = vsub.f32 %v222, %v234
    %v236 = vmul.f32 %v235, %v235
    %v237 = vsel %vm36, %v236, 0.0
    %v238 = vrot.slane %v237, 4
    %v239 = vadd.f32 %v237, %v238
    %v240 = vrot.slane %v239, 2
    %v241 = vadd.f32 %v239, %v240
    %v242 = vrot.slane %v241, 1
    %v243 = vadd.f32 %v241, %v242
    %v244 = vmul.f32 %v243, %v120
    %v245 = vadd.f32 %v244, 1e-05
    %v246 = vrsqrt.pop %v245
    %v247 = vmul.f32 %v225, %v246
    %v248 = vmul.f32 %v234, %v247
    %v249 = vsub.f32 %v226, %v248
    %v250 = vlaneseq
    %v251 = vshrl.u32 %v250, 7
    %v252 = vsub.s32 0, %v251
    %v253 = vrot.slane %v247, %v252
    %v254 = vmul.f32 %v222, %v253
    %v255 = vlaneseq
    %v256 = vshrl.u32 %v255, 7
    %v257 = vsub.s32 0, %v256
    %v258 = vrot.slane %v249, %v257
    %v259 = vadd.f32 %v254, %v258
    %v260 = vmax.f32 %v259, 0.0
    %v261 = vld [vmem:[%s3] sm:$0xff]
    %v262 = vld [vmem:[%s3 + $0x8] sm:$0xff]
    %v263 = vld [vmem:[%s7 + $0x4] sm:$0x1]
    %v264 = vlaneseq
    %v265 = vshrl.u32 %v264, 7
    %v266 = vsub.s32 0, %v265
    %v267 = vrot.slane %v263, %v266
    %v269 = vsel %vm36, %v260, 0
    %271 = vmatprep.subr.mxu0 0.0
    %272 = vmatpush1.msra.mxu0 0.0
    %273 = vmatprep.subr.mxu0 0.0
    %274 = vmatpush1.msra.mxu0 0.0
    %275 = vmatprep.subr.mxu0 0.0
    %276 = vmatpush1.msra.mxu0 0.0
    %277 = vmatprep.subr.mxu0 0.0
    %278 = vmatpush1.msra.mxu0 0.0
    %279 = vmatprep.subr.mxu0 0.0
    %280 = vmatpush1.msra.mxu0 0.0
    %281 = vmatprep.subr.mxu0 0.0
    %282 = vmatpush1.msra.mxu0 0.0
    %283 = vmatprep.subr.mxu0 0.0
    %284 = vmatpush1.msra.mxu0 0.0
    %285 = vmatprep.subr.mxu0 0.0
    %286 = vmatpush1.msra.mxu0 0.0
    %287 = vmatprep.subr.mxu0 0.0
    %288 = vmatpush1.msra.mxu0 0.0
    %289 = vmatprep.subr.mxu0 0.0
    %290 = vmatpush1.msra.mxu0 0.0
    %291 = vmatprep.subr.mxu0 0.0
    %292 = vmatpush1.msra.mxu0 0.0
    %293 = vmatprep.subr.mxu0 0.0
    %294 = vmatpush1.msra.mxu0 0.0
    %295 = vmatprep.subr.mxu0 0.0
    %296 = vmatpush1.msra.mxu0 0.0
    %297 = vmatprep.subr.mxu0 0.0
    %298 = vmatpush1.msra.mxu0 0.0
    %299 = vmatprep.subr.mxu0 0.0
    %300 = vmatpush1.msra.mxu0 %v262
    %301 = vmatprep.subr.mxu0 0.0
    %302 = vmatpush1.msra.mxu0 %v261
    %303 = vmatprep.subr.mxu0 0.0
    %304 = vmatpush2.msra.mxu0 0.0
    %305 = vmatprep.subr.mxu0 0.0
    %306 = vmatpush2.msra.mxu0 0.0
    %307 = vmatprep.subr.mxu0 0.0
    %308 = vmatpush2.msra.mxu0 0.0
    %309 = vmatprep.subr.mxu0 0.0
    %310 = vmatpush2.msra.mxu0 0.0
    %311 = vmatprep.subr.mxu0 0.0
    %312 = vmatpush2.msra.mxu0 0.0
    %313 = vmatprep.subr.mxu0 0.0
    %314 = vmatpush2.msra.mxu0 0.0
    %315 = vmatprep.subr.mxu0 0.0
    %316 = vmatpush2.msra.mxu0 0.0
    %317 = vmatprep.subr.mxu0 0.0
    %318 = vmatpush2.msra.mxu0 0.0
    %319 = vmatprep.subr.mxu0 0.0
    %320 = vmatpush2.msra.mxu0 0.0
    %321 = vmatprep.subr.mxu0 0.0
    %322 = vmatpush2.msra.mxu0 0.0
    %323 = vmatprep.subr.mxu0 0.0
    %324 = vmatpush2.msra.mxu0 0.0
    %325 = vmatprep.subr.mxu0 0.0
    %326 = vmatpush2.msra.mxu0 0.0
    %327 = vmatprep.subr.mxu0 0.0
    %328 = vmatpush2.msra.mxu0 0.0
    %329 = vmatprep.subr.mxu0 0.0
    %330 = vmatpush2.msra.mxu0 0.0
    %331 = vmatprep.subr.mxu0 0.0
    %332 = vmatpush2.msra.mxu0 0.0
    %333 = vmatprep.subr.mxu0 0.0
    %334 = vmatpush2.msra.mxu0 0.0
    %335 = vmatprep.mubr.f32.mxu0 0.0
    %336 = vmatmul.mubr.f32.gmra.mxu0 %v269
    %v337 = vpop.f32.mrf.mxu0
    %v338 = vadd.f32 %v267, %v337
    %v339 = vpop.f32.mrf.mxu0
    %340 = vdwg.mxu0
    %vm341 = vcmask 64512
    %342 = vst.msk [vmem:[#allocation2] sm:$0xff] %vm341, %v338
    %v343 = vld [vmem:[%s4] sm:$0xff]
    %v345 = vsel %vm341, %v338, 0
    %347 = vmatprep.subr.mxu0 0.0
    %348 = vmatpush1.msra.mxu0 0.0
    %349 = vmatprep.subr.mxu0 0.0
    %350 = vmatpush1.msra.mxu0 0.0
    %351 = vmatprep.subr.mxu0 0.0
    %352 = vmatpush1.msra.mxu0 0.0
    %353 = vmatprep.subr.mxu0 0.0
    %354 = vmatpush1.msra.mxu0 0.0
    %355 = vmatprep.subr.mxu0 0.0
    %356 = vmatpush1.msra.mxu0 0.0
    %357 = vmatprep.subr.mxu0 0.0
    %358 = vmatpush1.msra.mxu0 0.0
    %359 = vmatprep.subr.mxu0 0.0
    %360 = vmatpush1.msra.mxu0 0.0
    %361 = vmatprep.subr.mxu0 0.0
    %362 = vmatpush1.msra.mxu0 0.0
    %363 = vmatprep.subr.mxu0 0.0
    %364 = vmatpush1.msra.mxu0 0.0
    %365 = vmatprep.subr.mxu0 0.0
    %366 = vmatpush1.msra.mxu0 0.0
    %367 = vmatprep.subr.mxu0 0.0
    %368 = vmatpush1.msra.mxu0 0.0
    %369 = vmatprep.subr.mxu0 0.0
    %370 = vmatpush1.msra.mxu0 0.0
    %371 = vmatprep.subr.mxu0 0.0
    %372 = vmatpush1.msra.mxu0 0.0
    %373 = vmatprep.subr.mxu0 0.0
    %374 = vmatpush1.msra.mxu0 0.0
    %375 = vmatprep.subr.mxu0 0.0
    %376 = vmatpush1.msra.mxu0 0.0
    %377 = vmatprep.subr.mxu0 0.0
    %378 = vmatpush1.msra.mxu0 %v343
    %379 = vmatprep.subr.mxu0 0.0
    %380 = vmatpush2.msra.mxu0 0.0
    %381 = vmatprep.subr.mxu0 0.0
    %382 = vmatpush2.msra.mxu0 0.0
    %383 = vmatprep.subr.mxu0 0.0
    %384 = vmatpush2.msra.mxu0 0.0
    %385 = vmatprep.subr.mxu0 0.0
    %386 = vmatpush2.msra.mxu0 0.0
    %387 = vmatprep.subr.mxu0 0.0
    %388 = vmatpush2.msra.mxu0 0.0
    %389 = vmatprep.subr.mxu0 0.0
    %390 = vmatpush2.msra.mxu0 0.0
    %391 = vmatprep.subr.mxu0 0.0
    %392 = vmatpush2.msra.mxu0 0.0
    %393 = vmatprep.subr.mxu0 0.0
    %394 = vmatpush2.msra.mxu0 0.0
    %395 = vmatprep.subr.mxu0 0.0
    %396 = vmatpush2.msra.mxu0 0.0
    %397 = vmatprep.subr.mxu0 0.0
    %398 = vmatpush2.msra.mxu0 0.0
    %399 = vmatprep.subr.mxu0 0.0
    %400 = vmatpush2.msra.mxu0 0.0
    %401 = vmatprep.subr.mxu0 0.0
    %402 = vmatpush2.msra.mxu0 0.0
    %403 = vmatprep.subr.mxu0 0.0
    %404 = vmatpush2.msra.mxu0 0.0
    %405 = vmatprep.subr.mxu0 0.0
    %406 = vmatpush2.msra.mxu0 0.0
    %407 = vmatprep.subr.mxu0 0.0
    %408 = vmatpush2.msra.mxu0 0.0
    %409 = vmatprep.subr.mxu0 0.0
    %410 = vmatpush2.msra.mxu0 0.0
    %411 = vmatprep.mubr.f32.mxu0 0.0
    %412 = vmatmul.mubr.f32.gmra.mxu0 %v345
    %v413 = vpop.f32.mrf.mxu0
    %v414 = vadd.f32 0.0, %v413
    %v415 = vpop.f32.mrf.mxu0
    %416 = vdwg.mxu0
    %v417 = vld [vmem:[%s7 + $0x5] sm:$0x1]
    %v418 = vld [vmem:[%s7 + $0x6] sm:$0x1]
    %v419 = vsel %vm36, %v414, 0.0
    %v420 = vrot.slane %v419, 4
    %v421 = vadd.f32 %v419, %v420
    %v422 = vrot.slane %v421, 2
    %v423 = vadd.f32 %v421, %v422
    %v424 = vrot.slane %v423, 1
    %v425 = vadd.f32 %v423, %v424
    %v426 = vmul.f32 %v425, %v120
    %v427 = vsub.f32 %v414, %v426
    %v428 = vmul.f32 %v427, %v427
    %v429 = vsel %vm36, %v428, 0.0
    %v430 = vrot.slane %v429, 4
    %v431 = vadd.f32 %v429, %v430
    %v432 = vrot.slane %v431, 2
    %v433 = vadd.f32 %v431, %v432
    %v434 = vrot.slane %v433, 1
    %v435 = vadd.f32 %v433, %v434
    %v436 = vmul.f32 %v435, %v120
    %v437 = vadd.f32 %v436, 1e-05
    %v438 = vrsqrt.pop %v437
    %v439 = vmul.f32 %v417, %v438
    %v440 = vmul.f32 %v426, %v439
    %v441 = vsub.f32 %v418, %v440
    %v442 = vlaneseq
    %v443 = vshrl.u32 %v442, 7
    %v444 = vsub.s32 0, %v443
    %v445 = vrot.slane %v439, %v444
    %v446 = vmul.f32 %v414, %v445
    %v447 = vlaneseq
    %v448 = vshrl.u32 %v447, 7
    %v449 = vsub.s32 0, %v448
    %v450 = vrot.slane %v441, %v449
    %v451 = vadd.f32 %v446, %v450
    %v452 = vmax.f32 %v451, 0.0
    %v453 = vld [vmem:[%s5] sm:$0xff]
    %v454 = vld [vmem:[%s5 + $0x8] sm:$0xff]
    %v456 = vsel %vm36, %v452, 0
    %458 = vmatprep.subr.mxu0 0.0
    %459 = vmatpush1.msra.mxu0 0.0
    %460 = vmatprep.subr.mxu0 0.0
    %461 = vmatpush1.msra.mxu0 0.0
    %462 = vmatprep.subr.mxu0 0.0
    %463 = vmatpush1.msra.mxu0 0.0
    %464 = vmatprep.subr.mxu0 0.0
    %465 = vmatpush1.msra.mxu0 0.0
    %466 = vmatprep.subr.mxu0 0.0
    %467 = vmatpush1.msra.mxu0 0.0
    %468 = vmatprep.subr.mxu0 0.0
    %469 = vmatpush1.msra.mxu0 0.0
    %470 = vmatprep.subr.mxu0 0.0
    %471 = vmatpush1.msra.mxu0 0.0
    %472 = vmatprep.subr.mxu0 0.0
    %473 = vmatpush1.msra.mxu0 0.0
    %474 = vmatprep.subr.mxu0 0.0
    %475 = vmatpush1.msra.mxu0 0.0
    %476 = vmatprep.subr.mxu0 0.0
    %477 = vmatpush1.msra.mxu0 0.0
    %478 = vmatprep.subr.mxu0 0.0
    %479 = vmatpush1.msra.mxu0 0.0
    %480 = vmatprep.subr.mxu0 0.0
    %481 = vmatpush1.msra.mxu0 0.0
    %482 = vmatprep.subr.mxu0 0.0
    %483 = vmatpush1.msra.mxu0 0.0
    %484 = vmatprep.subr.mxu0 0.0
    %485 = vmatpush1.msra.mxu0 0.0
    %486 = vmatprep.subr.mxu0 0.0
    %487 = vmatpush1.msra.mxu0 %v454
    %488 = vmatprep.subr.mxu0 0.0
    %489 = vmatpush1.msra.mxu0 %v453
    %490 = vmatprep.subr.mxu0 0.0
    %491 = vmatpush2.msra.mxu0 0.0
    %492 = vmatprep.subr.mxu0 0.0
    %493 = vmatpush2.msra.mxu0 0.0
    %494 = vmatprep.subr.mxu0 0.0
    %495 = vmatpush2.msra.mxu0 0.0
    %496 = vmatprep.subr.mxu0 0.0
    %497 = vmatpush2.msra.mxu0 0.0
    %498 = vmatprep.subr.mxu0 0.0
    %499 = vmatpush2.msra.mxu0 0.0
    %500 = vmatprep.subr.mxu0 0.0
    %501 = vmatpush2.msra.mxu0 0.0
    %502 = vmatprep.subr.mxu0 0.0
    %503 = vmatpush2.msra.mxu0 0.0
    %504 = vmatprep.subr.mxu0 0.0
    %505 = vmatpush2.msra.mxu0 0.0
    %506 = vmatprep.subr.mxu0 0.0
    %507 = vmatpush2.msra.mxu0 0.0
    %508 = vmatprep.subr.mxu0 0.0
    %509 = vmatpush2.msra.mxu0 0.0
    %510 = vmatprep.subr.mxu0 0.0
    %511 = vmatpush2.msra.mxu0 0.0
    %512 = vmatprep.subr.mxu0 0.0
    %513 = vmatpush2.msra.mxu0 0.0
    %514 = vmatprep.subr.mxu0 0.0
    %515 = vmatpush2.msra.mxu0 0.0
    %516 = vmatprep.subr.mxu0 0.0
    %517 = vmatpush2.msra.mxu0 0.0
    %518 = vmatprep.subr.mxu0 0.0
    %519 = vmatpush2.msra.mxu0 0.0
    %520 = vmatprep.subr.mxu0 0.0
    %521 = vmatpush2.msra.mxu0 0.0
    %522 = vmatprep.mubr.f32.mxu0 0.0
    %523 = vmatmul.mubr.f32.gmra.mxu0 %v456
    %v524 = vpop.f32.mrf.mxu0
    %v525 = vadd.f32 0.0, %v524
    %v526 = vpop.f32.mrf.mxu0
    %527 = vdwg.mxu0
    %v528 = vld [vmem:[%s7 + $0x7] sm:$0x1]
    %v529 = vld [vmem:[%s7 + $0x8] sm:$0x1]
    %v530 = vsel %vm112, %v525, 0.0
    %v531 = vrot.slane %v530, 4
    %v532 = vadd.f32 %v530, %v531
    %v533 = vrot.slane %v532, 2
    %v534 = vadd.f32 %v532, %v533
    %v535 = vrot.slane %v534, 1
    %v536 = vadd.f32 %v534, %v535
    %v537 = vmul.f32 %v536, %v120
    %v538 = vsub.f32 %v525, %v537
    %v539 = vmul.f32 %v538, %v538
    %v540 = vsel %vm112, %v539, 0.0
    %v541 = vrot.slane %v540, 4
    %v542 = vadd.f32 %v540, %v541
    %v543 = vrot.slane %v542, 2
    %v544 = vadd.f32 %v542, %v543
    %v545 = vrot.slane %v544, 1
    %v546 = vadd.f32 %v544, %v545
    %v547 = vmul.f32 %v546, %v120
    %v548 = vadd.f32 %v547, 1e-05
    %v549 = vrsqrt.pop %v548
    %v550 = vmul.f32 %v528, %v549
    %v551 = vmul.f32 %v537, %v550
    %v552 = vsub.f32 %v529, %v551
    %v553 = vlaneseq
    %v554 = vshrl.u32 %v553, 7
    %v555 = vsub.s32 0, %v554
    %v556 = vrot.slane %v550, %v555
    %v557 = vmul.f32 %v525, %v556
    %v558 = vlaneseq
    %v559 = vshrl.u32 %v558, 7
    %v560 = vsub.s32 0, %v559
    %v561 = vrot.slane %v552, %v560
    %v562 = vadd.f32 %v557, %v561
    %v563 = vmax.f32 %v562, 0.0
    %v564 = vld [vmem:[%s6] sm:$0xff]
    %v565 = vld [vmem:[%s6 + $0x8] sm:$0xff]
    %v566 = vld [vmem:[%s6 + $0x10] sm:$0xff]
    %v567 = vld [vmem:[%s6 + $0x18] sm:$0xff]
    %v568 = vld [vmem:[%s7 + $0x9] sm:$0x1]
    %v569 = vlaneseq
    %v570 = vshrl.u32 %v569, 7
    %v571 = vsub.s32 0, %v570
    %v572 = vrot.slane %v568, %v571
    %v574 = vsel %vm112, %v563, 0
    %576 = vmatprep.subr.mxu0 0.0
    %577 = vmatpush1.msra.mxu0 0.0
    %578 = vmatprep.subr.mxu0 0.0
    %579 = vmatpush1.msra.mxu0 0.0
    %580 = vmatprep.subr.mxu0 0.0
    %581 = vmatpush1.msra.mxu0 0.0
    %582 = vmatprep.subr.mxu0 0.0
    %583 = vmatpush1.msra.mxu0 0.0
    %584 = vmatprep.subr.mxu0 0.0
    %585 = vmatpush1.msra.mxu0 0.0
    %586 = vmatprep.subr.mxu0 0.0
    %587 = vmatpush1.msra.mxu0 0.0
    %588 = vmatprep.subr.mxu0 0.0
    %589 = vmatpush1.msra.mxu0 0.0
    %590 = vmatprep.subr.mxu0 0.0
    %591 = vmatpush1.msra.mxu0 0.0
    %592 = vmatprep.subr.mxu0 0.0
    %593 = vmatpush1.msra.mxu0 0.0
    %594 = vmatprep.subr.mxu0 0.0
    %595 = vmatpush1.msra.mxu0 0.0
    %596 = vmatprep.subr.mxu0 0.0
    %597 = vmatpush1.msra.mxu0 0.0
    %598 = vmatprep.subr.mxu0 0.0
    %599 = vmatpush1.msra.mxu0 0.0
    %600 = vmatprep.subr.mxu0 0.0
    %601 = vmatpush1.msra.mxu0 %v567
    %602 = vmatprep.subr.mxu0 0.0
    %603 = vmatpush1.msra.mxu0 %v566
    %604 = vmatprep.subr.mxu0 0.0
    %605 = vmatpush1.msra.mxu0 %v565
    %606 = vmatprep.subr.mxu0 0.0
    %607 = vmatpush1.msra.mxu0 %v564
    %608 = vmatprep.subr.mxu0 0.0
    %609 = vmatpush2.msra.mxu0 0.0
    %610 = vmatprep.subr.mxu0 0.0
    %611 = vmatpush2.msra.mxu0 0.0
    %612 = vmatprep.subr.mxu0 0.0
    %613 = vmatpush2.msra.mxu0 0.0
    %614 = vmatprep.subr.mxu0 0.0
    %615 = vmatpush2.msra.mxu0 0.0
    %616 = vmatprep.subr.mxu0 0.0
    %617 = vmatpush2.msra.mxu0 0.0
    %618 = vmatprep.subr.mxu0 0.0
    %619 = vmatpush2.msra.mxu0 0.0
    %620 = vmatprep.subr.mxu0 0.0
    %621 = vmatpush2.msra.mxu0 0.0
    %622 = vmatprep.subr.mxu0 0.0
    %623 = vmatpush2.msra.mxu0 0.0
    %624 = vmatprep.subr.mxu0 0.0
    %625 = vmatpush2.msra.mxu0 0.0
    %626 = vmatprep.subr.mxu0 0.0
    %627 = vmatpush2.msra.mxu0 0.0
    %628 = vmatprep.subr.mxu0 0.0
    %629 = vmatpush2.msra.mxu0 0.0
    %630 = vmatprep.subr.mxu0 0.0
    %631 = vmatpush2.msra.mxu0 0.0
    %632 = vmatprep.subr.mxu0 0.0
    %633 = vmatpush2.msra.mxu0 0.0
    %634 = vmatprep.subr.mxu0 0.0
    %635 = vmatpush2.msra.mxu0 0.0
    %636 = vmatprep.subr.mxu0 0.0
    %637 = vmatpush2.msra.mxu0 0.0
    %638 = vmatprep.subr.mxu0 0.0
    %639 = vmatpush2.msra.mxu0 0.0
    %640 = vmatprep.mubr.f32.mxu0 0.0
    %641 = vmatmul.mubr.f32.gmra.mxu0 %v574
    %v642 = vpop.f32.mrf.mxu0
    %v643 = vadd.f32 %v572, %v642
    %v644 = vpop.f32.mrf.mxu0
    %645 = vdwg.mxu0
    %646 = vst.msk [vmem:[#allocation4] sm:$0xff] %vm36, %v643
    // Predicated region
    $region34: #{tpu_custom_call.1} parent=1 // pred_check
      _
    $region35: #{tpu_custom_call.1} parent=1 // pred_check_branch
      %648 = sbr.rel (0) target = $region37
    $region36: #{tpu_custom_call.1} parent=1 // pred_region
      %s650 = ssub.s32 128, 128
      %651 = vsyncadd [#allocation3], %s650
      %s653 = sshll.u32 [#allocation2], 4
      %s654 = int_to_ptr.vmem [resolvable:$true] %s653
      %656 = dma.vmem_to_hbm [thread:$0]  %s654, 128, %s8, [#allocation3]
    $region37: #{tpu_custom_call.1} parent=1 // pred_fallthru
      _
    // Predicated region
    $region38: #{tpu_custom_call.1} parent=1 // pred_check
      _
    $region39: #{tpu_custom_call.1} parent=1 // pred_check_branch
      %658 = sbr.rel (0) target = $region41
    $region40: #{tpu_custom_call.1} parent=1 // pred_region
      %s660 = ssub.s32 128, 128
      %661 = vsyncadd [#allocation5], %s660
      %s663 = sshll.u32 [#allocation4], 4
      %s664 = int_to_ptr.vmem [resolvable:$true] %s663
      %666 = dma.vmem_to_hbm [thread:$0]  %s664, 128, %s9, [#allocation5]
    $region41: #{tpu_custom_call.1} parent=1 // pred_fallthru
      _
    // Predicated region
    $region42: #{tpu_custom_call.1} parent=1 // pred_check
      _
    $region43: #{tpu_custom_call.1} parent=1 // pred_check_branch
      %668 = sbr.rel (0) target = $region45
    $region44: #{tpu_custom_call.1} parent=1 // pred_region
      %669 = dma.done [#allocation3], 128
    $region45: #{tpu_custom_call.1} parent=1 // pred_fallthru
      _
    // Predicated region
    $region46: #{tpu_custom_call.1} parent=1 // pred_check
      _
    $region47: #{tpu_custom_call.1} parent=1 // pred_check_branch
      %671 = sbr.rel (0) target = $region49
    $region48: #{tpu_custom_call.1} parent=1 // pred_region
      %672 = dma.done [#allocation5], 128
    $region49: #{tpu_custom_call.1} parent=1 // pred_fallthru
      _
    %673 = vsyncpa [#allocation3], 1
    %674 = vsyncpa [#allocation5], 1

</llo_original>
